<compile_context>
chip_gen: v6e
topology: v6e:2x2x1
jax: 0.10.0
libtpu: 0.0.40
codegen_flags: <defaults>
</compile_context>

<pallas_src>
import jax
import jax.numpy as jnp
from jax.experimental import pallas as pl
from jax.experimental.pallas import tpu as pltpu


def _round_up(n, m):
    return ((n + m - 1) // m) * m


def _pad2(a, rows, cols):
    r, c = a.shape
    return jnp.pad(a, ((0, rows - r), (0, cols - c)))


def _qnet_kernel(x_ref, w1_ref, b1_ref, w3_ref, b3_ref, w2_ref, b2_ref, o_ref):
    # fc1 in full f32 (tiny K -> ~free on the MXU, keeps raw-state precision).
    h1 = jnp.dot(x_ref[...], w1_ref[...], preferred_element_type=jnp.float32)
    h1 = jnp.maximum(h1 + b1_ref[...], 0.0)
    # fc3 + ReLU: bf16 MXU inputs, f32 accumulation; bias/ReLU in f32 (v5e-safe).
    h3 = jnp.dot(h1.astype(w3_ref.dtype), w3_ref[...], preferred_element_type=jnp.float32)
    h3 = jnp.maximum(h3 + b3_ref[...], 0.0)
    # fc2 (no activation): compute on the 128-padded weights, store only the
    # valid action_dim columns (narrow / masked store -> no padded HBM writeback).
    out = jnp.dot(h3.astype(w2_ref.dtype), w2_ref[...], preferred_element_type=jnp.float32)
    out = out + b2_ref[...]
    o_ref[...] = out[:, : o_ref.shape[1]].astype(o_ref.dtype)


def prepare_qnet_params(params, *, matmul_dtype=jnp.bfloat16):
    """Pad + cast the weights ONCE (hoisted out of the per-call path).

    Zero padding is exact-preserving (ReLU(0)=0, zero rows/cols contribute nothing).
    Weights are stored transposed: (in, out); biases are (1, out).
    """
    w1, b1, w3, b3, w2, b2 = (params[k] for k in ("w1", "b1", "w3", "b3", "w2", "b2"))
    state_dim, hidden_dim = w1.shape
    mid_dim = w3.shape[1]
    action_dim = w2.shape[1]

    h_pad = _round_up(max(hidden_dim, 128), 128)   # fc1 out / fc3 in
    m_pad = _round_up(max(mid_dim, 128), 128)      # fc3 out / fc2 in
    n_pad = _round_up(max(action_dim, 128), 128)   # fc2 compute width (stored narrow)

    return {
        "state_dim": int(state_dim),
        "action_dim": int(action_dim),
        # fc1 stays in f32 (accuracy-for-free; kernel is not MXU-bound).
        "w1": _pad2(w1, state_dim, h_pad).astype(jnp.float32),
        "b1": _pad2(b1, 1, h_pad).astype(jnp.float32),
        "w3": _pad2(w3, h_pad, m_pad).astype(matmul_dtype),
        "b3": _pad2(b3, 1, m_pad).astype(jnp.float32),
        "w2": _pad2(w2, m_pad, n_pad).astype(matmul_dtype),
        "b2": _pad2(b2, 1, n_pad).astype(jnp.float32),
    }


def qnet_forward(x, prepared, *, tile_b=1024):
    """x: (B, state_dim) f32. prepared: output of prepare_qnet_params.
    Returns (B, action_dim) f32, same math as PyTorch fc2(relu(fc3(relu(fc1(x)))))."""
    B, state_dim = x.shape
    assert state_dim == prepared["state_dim"]
    action_dim = prepared["action_dim"]
    w1, b1, w3, b3, w2, b2 = (prepared[k] for k in ("w1", "b1", "w3", "b3", "w2", "b2"))

    x = x.astype(jnp.float32)

    # Batch tile: multiple of 8, capped so tiny batches are not over-padded.
    # Pallas masks the ragged last tile (garbage rows never reach valid output rows).
    tb = _round_up(min(tile_b, _round_up(B, 8)), 8)
    grid = (pl.cdiv(B, tb),)

    resident = lambda shape: pl.BlockSpec(shape, lambda i: (0, 0))  # stays in VMEM

    flops = 2 * B * (state_dim * w1.shape[1] + w3.shape[0] * w3.shape[1]
                     + w2.shape[0] * w2.shape[1])
    bytes_accessed = (
        int(x.size) * x.dtype.itemsize
        + sum(int(a.size) * a.dtype.itemsize for a in (w1, b1, w3, b3, w2, b2))
        + B * action_dim * 4
    )

    out = pl.pallas_call(
        _qnet_kernel,
        out_shape=jax.ShapeDtypeStruct((B, action_dim), jnp.float32),
        grid=grid,
        in_specs=[
            pl.BlockSpec((tb, state_dim), lambda i: (i, 0)),   # streamed batch tile (f32)
            resident(w1.shape), resident(b1.shape),
            resident(w3.shape), resident(b3.shape),
            resident(w2.shape), resident(b2.shape),
        ],
        # Narrow output block: last dim equals the full array dim (legal < 128).
        out_specs=pl.BlockSpec((tb, action_dim), lambda i: (i, 0)),
        compiler_params=pltpu.CompilerParams(
            dimension_semantics=("parallel",),
            vmem_limit_bytes=32 * 1024 * 1024,
        ),
        cost_estimate=pl.CostEstimate(
            flops=flops, transcendentals=0, bytes_accessed=bytes_accessed
        ),
    )(x, w1, b1, w3, b3, w2, b2)
    return out


def init_qnet_params(key, state_dim, hidden_dim, action_dim):
    """Deterministic init mimicking torch.nn.Linear default (uniform +-1/sqrt(fan_in)).
    Weights stored transposed: (in, out)."""
    ks = jax.random.split(key, 6)

    def linear(kw, kb, fan_in, fan_out):
        bound = 1.0 / jnp.sqrt(jnp.float32(fan_in))
        w = jax.random.uniform(kw, (fan_in, fan_out), jnp.float32, -bound, bound)
        b = jax.random.uniform(kb, (1, fan_out), jnp.float32, -bound, bound)
        return w, b

    w1, b1 = linear(ks[0], ks[1], state_dim, hidden_dim)   # fc1
    w3, b3 = linear(ks[2], ks[3], hidden_dim, 128)         # fc3
    w2, b2 = linear(ks[4], ks[5], 128, action_dim)         # fc2
    return {"w1": w1, "b1": b1, "w3": w3, "b3": b3, "w2": w2, "b2": b2}


if __name__ == "__main__":
    key = jax.random.PRNGKey(0)
    k_x, k_p = jax.random.split(key)

    batch, state_dim, hidden_dim, action_dim = 8, 4, 32, 2
    x = jax.random.normal(k_x, (batch, state_dim), jnp.float32)
    params = init_qnet_params(k_p, state_dim, hidden_dim, action_dim)

    # Weight padding / casting hoisted out of the per-call path (do once).
    prepared = prepare_qnet_params(params)

    out = qnet_forward(x, prepared)
    jax.block_until_ready(out)

    # Reference in plain JAX f32 (same math as the PyTorch forward).
    h1 = jnp.maximum(x @ params["w1"] + params["b1"], 0.0)
    h3 = jnp.maximum(h1 @ params["w3"] + params["b3"], 0.0)
    ref = h3 @ params["w2"] + params["b2"]

    assert out.shape == (batch, action_dim)
    # fc1 is f32; only fc3/fc2 use bf16 inputs with f32 accumulation.
    assert jnp.allclose(out, ref, atol=2e-2, rtol=2e-2), (
        f"max abs err {float(jnp.max(jnp.abs(out - ref)))}"
    )

    print("KERNEL_OK")
</pallas_src>

<mosaic_0001>
module attributes {stable_mosaic.version = 11 : i64} {
  func.func @_qnet_kernel(%arg0: i32, %arg1: memref<8x4xf32, #tpu.memory_space<vmem>>, %arg2: memref<4x128xf32, #tpu.memory_space<vmem>>, %arg3: memref<1x128xf32, #tpu.memory_space<vmem>>, %arg4: memref<128x128xbf16, #tpu.memory_space<vmem>>, %arg5: memref<1x128xf32, #tpu.memory_space<vmem>>, %arg6: memref<128x128xbf16, #tpu.memory_space<vmem>>, %arg7: memref<1x128xf32, #tpu.memory_space<vmem>>, %arg8: memref<8x2xf32, #tpu.memory_space<vmem>>) attributes {dimension_semantics = [#tpu.dimension_semantics<parallel>], iteration_bounds = array<i64: 1>, scalar_prefetch = 0 : i64, scratch_operands = 0 : i64, tpu.core_type = #tpu.core_type<tc>, window_params = [{transform_indices = @transform_0, window_bounds = array<i64: 8, 4>}, {pipeline_mode = #tpu.pipeline_mode<synchronous>, transform_indices = @transform_1, window_bounds = array<i64: 4, 128>}, {pipeline_mode = #tpu.pipeline_mode<synchronous>, transform_indices = @transform_2, window_bounds = array<i64: 1, 128>}, {pipeline_mode = #tpu.pipeline_mode<synchronous>, transform_indices = @transform_3, window_bounds = array<i64: 128, 128>}, {pipeline_mode = #tpu.pipeline_mode<synchronous>, transform_indices = @transform_4, window_bounds = array<i64: 1, 128>}, {pipeline_mode = #tpu.pipeline_mode<synchronous>, transform_indices = @transform_5, window_bounds = array<i64: 128, 128>}, {pipeline_mode = #tpu.pipeline_mode<synchronous>, transform_indices = @transform_6, window_bounds = array<i64: 1, 128>}, {transform_indices = @transform_7, window_bounds = array<i64: 8, 2>}]} {
    %c0 = arith.constant 0 : index
    %c0_0 = arith.constant 0 : index
    %0 = vector.load %arg1[%c0, %c0_0] : memref<8x4xf32, #tpu.memory_space<vmem>>, vector<8x4xf32>
    %c0_1 = arith.constant 0 : index
    %c0_2 = arith.constant 0 : index
    %1 = vector.load %arg2[%c0_1, %c0_2] : memref<4x128xf32, #tpu.memory_space<vmem>>, vector<4x128xf32>
    %cst = arith.constant dense<0.000000e+00> : vector<8x128xf32>
    %2 = tpu.matmul %0, %1, %cst {dimension_numbers = #tpu.dot_dimension_numbers<[1], [0], [0], [1], [0, 0, 1, 1], [], []>} : vector<8x4xf32>, vector<4x128xf32>, vector<8x128xf32> -> vector<8x128xf32>
    %c0_3 = arith.constant 0 : index
    %c0_4 = arith.constant 0 : index
    %3 = vector.load %arg3[%c0_3, %c0_4] : memref<1x128xf32, #tpu.memory_space<vmem>>, vector<1x128xf32>
    %4 = vector.broadcast %3 : vector<1x128xf32> to vector<8x128xf32>
    %5 = arith.addf %2, %4 : vector<8x128xf32>
    %cst_5 = arith.constant 0.000000e+00 : f32
    %6 = vector.broadcast %cst_5 : f32 to vector<8x128xf32>
    %7 = arith.maximumf %5, %6 : vector<8x128xf32>
    %8 = arith.truncf %7 : vector<8x128xf32> to vector<8x128xbf16>
    %c0_6 = arith.constant 0 : index
    %c0_7 = arith.constant 0 : index
    %9 = vector.load %arg4[%c0_6, %c0_7] : memref<128x128xbf16, #tpu.memory_space<vmem>>, vector<128x128xbf16>
    %cst_8 = arith.constant dense<0.000000e+00> : vector<8x128xf32>
    %10 = tpu.matmul %8, %9, %cst_8 {dimension_numbers = #tpu.dot_dimension_numbers<[1], [0], [0], [1], [0, 0, 1, 1], [], []>} : vector<8x128xbf16>, vector<128x128xbf16>, vector<8x128xf32> -> vector<8x128xf32>
    %c0_9 = arith.constant 0 : index
    %c0_10 = arith.constant 0 : index
    %11 = vector.load %arg5[%c0_9, %c0_10] : memref<1x128xf32, #tpu.memory_space<vmem>>, vector<1x128xf32>
    %12 = vector.broadcast %11 : vector<1x128xf32> to vector<8x128xf32>
    %13 = arith.addf %10, %12 : vector<8x128xf32>
    %cst_11 = arith.constant 0.000000e+00 : f32
    %14 = vector.broadcast %cst_11 : f32 to vector<8x128xf32>
    %15 = arith.maximumf %13, %14 : vector<8x128xf32>
    %16 = arith.truncf %15 : vector<8x128xf32> to vector<8x128xbf16>
    %c0_12 = arith.constant 0 : index
    %c0_13 = arith.constant 0 : index
    %17 = vector.load %arg6[%c0_12, %c0_13] : memref<128x128xbf16, #tpu.memory_space<vmem>>, vector<128x128xbf16>
    %cst_14 = arith.constant dense<0.000000e+00> : vector<8x128xf32>
    %18 = tpu.matmul %16, %17, %cst_14 {dimension_numbers = #tpu.dot_dimension_numbers<[1], [0], [0], [1], [0, 0, 1, 1], [], []>} : vector<8x128xbf16>, vector<128x128xbf16>, vector<8x128xf32> -> vector<8x128xf32>
    %c0_15 = arith.constant 0 : index
    %c0_16 = arith.constant 0 : index
    %19 = vector.load %arg7[%c0_15, %c0_16] : memref<1x128xf32, #tpu.memory_space<vmem>>, vector<1x128xf32>
    %20 = vector.broadcast %19 : vector<1x128xf32> to vector<8x128xf32>
    %21 = arith.addf %18, %20 : vector<8x128xf32>
    %22 = vector.extract_strided_slice %21 {offsets = [0, 0], sizes = [8, 2], strides = [1, 1]} : vector<8x128xf32> to vector<8x2xf32>
    %c0_17 = arith.constant 0 : index
    %c0_18 = arith.constant 0 : index
    %23 = vector.load %arg8[%c0_17, %c0_18] : memref<8x2xf32, #tpu.memory_space<vmem>>, vector<8x2xf32>
    tpu.vector_store %arg8[%c0_17, %c0_18], %22 {strides = array<i32>} : memref<8x2xf32, #tpu.memory_space<vmem>>, vector<8x2xf32>,
    return
  }
  func.func @transform_0(%arg0: i32) -> (i32, i32) {
    %c0_i32 = arith.constant 0 : i32
    %c0_i32_0 = arith.constant 0 : i32
    return %arg0, %c0_i32 : i32, i32
  }
  func.func @transform_1(%arg0: i32) -> (i32, i32) {
    %c0_i32 = arith.constant 0 : i32
    %c0_i32_0 = arith.constant 0 : i32
    %c0_i32_1 = arith.constant 0 : i32
    return %c0_i32, %c0_i32_0 : i32, i32
  }
  func.func @transform_2(%arg0: i32) -> (i32, i32) {
    %c0_i32 = arith.constant 0 : i32
    %c0_i32_0 = arith.constant 0 : i32
    %c0_i32_1 = arith.constant 0 : i32
    return %c0_i32, %c0_i32_0 : i32, i32
  }
  func.func @transform_3(%arg0: i32) -> (i32, i32) {
    %c0_i32 = arith.constant 0 : i32
    %c0_i32_0 = arith.constant 0 : i32
    %c0_i32_1 = arith.constant 0 : i32
    return %c0_i32, %c0_i32_0 : i32, i32
  }
  func.func @transform_4(%arg0: i32) -> (i32, i32) {
    %c0_i32 = arith.constant 0 : i32
    %c0_i32_0 = arith.constant 0 : i32
    %c0_i32_1 = arith.constant 0 : i32
    return %c0_i32, %c0_i32_0 : i32, i32
  }
  func.func @transform_5(%arg0: i32) -> (i32, i32) {
    %c0_i32 = arith.constant 0 : i32
    %c0_i32_0 = arith.constant 0 : i32
    %c0_i32_1 = arith.constant 0 : i32
    return %c0_i32, %c0_i32_0 : i32, i32
  }
  func.func @transform_6(%arg0: i32) -> (i32, i32) {
    %c0_i32 = arith.constant 0 : i32
    %c0_i32_0 = arith.constant 0 : i32
    %c0_i32_1 = arith.constant 0 : i32
    return %c0_i32, %c0_i32_0 : i32, i32
  }
  func.func @transform_7(%arg0: i32) -> (i32, i32) {
    %c0_i32 = arith.constant 0 : i32
    %c0_i32_0 = arith.constant 0 : i32
    return %arg0, %c0_i32 : i32, i32
  }
}

</mosaic_0001>

<llo_original>
// kernel: tpu_custom_call.1
$region0: #{tpu_custom_call.1}
  #allocation0 [shape = 'u32[]', space=smem, size = 0x4, offset = 0x4, fixed_abs, tag = 'smem constant byte address 0x4 - core index']
  #allocation1 [shape = 'u32[144,128]{1,0:T(1,128)}', space=vmem, size = 0x12000, scoped, tag = 'internal scratch']
  %s0 = inlined_call_operand.vmem [shape: f32[8,4], index: 0, kind: input, shape index: {}]
  %s1 = inlined_call_operand.vmem [shape: f32[4,128], index: 1, kind: input, shape index: {}]
  %s2 = inlined_call_operand.vmem [shape: f32[1,128], index: 2, kind: input, shape index: {}]
  %s3 = inlined_call_operand.hbm [shape: bf16[128,128], index: 3, kind: input, shape index: {}]
  %s4 = inlined_call_operand.vmem [shape: f32[1,128], index: 4, kind: input, shape index: {}]
  %s5 = inlined_call_operand.hbm [shape: bf16[128,128], index: 5, kind: input, shape index: {}]
  %s6 = inlined_call_operand.vmem [shape: f32[1,128], index: 6, kind: input, shape index: {}]
  %s7 = inlined_call_operand.vmem [shape: f32[8,2], index: 7, kind: output, shape index: {}]
  %s8 = sld [smem:[#allocation0]]
  $region46: #{tpu_custom_call.1} parent=0
    _
  %s10 = ssub.s32 1, %s8
  %s11 = scalar_select 0, %s10, %s8
  $region1: #{tpu_custom_call.1} parent=0
    #allocation2 [shape = 'u8[32768]{0}', space=vmem, size = 0x8000, scoped, tag = 'input window, operand 3, single buffered']
    #allocation3 [shape = 's32[1]{0}', space=sflag, size = 0x4, scoped, tag = 'scoped memory for tpu_custom_call.1']
    #allocation4 [shape = 'u8[32768]{0}', space=vmem, size = 0x8000, scoped, tag = 'input window, operand 5, single buffered']
    #allocation5 [shape = 's32[1]{0}', space=sflag, size = 0x4, scoped, tag = 'scoped memory for tpu_custom_call.1']
    %12 = vsyncpa [#allocation3], 0
    %13 = vsyncpa [#allocation5], 0
    // Predicated region
    $region2: #{tpu_custom_call.1} parent=1 // pred_check
      _
    $region3: #{tpu_custom_call.1} parent=1 // pred_check_branch
      %15 = sbr.rel (0) target = $region5
    $region4: #{tpu_custom_call.1} parent=1 // pred_region
      _
    $region5: #{tpu_custom_call.1} parent=1 // pred_fallthru
      _
    // Predicated region
    $region6: #{tpu_custom_call.1} parent=1 // pred_check
      _
    $region7: #{tpu_custom_call.1} parent=1 // pred_check_branch
      %17 = sbr.rel (0) target = $region9
    $region8: #{tpu_custom_call.1} parent=1 // pred_region
      _
    $region9: #{tpu_custom_call.1} parent=1 // pred_fallthru
      _
    // Predicated region
    $region10: #{tpu_custom_call.1} parent=1 // pred_check
      _
    $region11: #{tpu_custom_call.1} parent=1 // pred_check_branch
      %19 = sbr.rel (0) target = $region13
    $region12: #{tpu_custom_call.1} parent=1 // pred_region
      _
    $region13: #{tpu_custom_call.1} parent=1 // pred_fallthru
      _
    // Predicated region
    $region14: #{tpu_custom_call.1} parent=1 // pred_check
      _
    $region15: #{tpu_custom_call.1} parent=1 // pred_check_branch
      %21 = sbr.rel (0) target = $region17
    $region16: #{tpu_custom_call.1} parent=1 // pred_region
      %s23 = ssub.s32 1024, 1024
      %24 = vsyncadd [#allocation3], %s23
      %s25 = sshll.u32 [#allocation2], 4
      %s26 = int_to_ptr.vmem [resolvable:$true] %s25
      %31 = dma.hbm_to_vmem [thread:$0]  %s3, 1024, %s26, [#allocation3], 64, 64, 4
    $region17: #{tpu_custom_call.1} parent=1 // pred_fallthru
      _
    // Predicated region
    $region18: #{tpu_custom_call.1} parent=1 // pred_check
      _
    $region19: #{tpu_custom_call.1} parent=1 // pred_check_branch
      %33 = sbr.rel (0) target = $region21
    $region20: #{tpu_custom_call.1} parent=1 // pred_region
      _
    $region21: #{tpu_custom_call.1} parent=1 // pred_fallthru
      _
    // Predicated region
    $region22: #{tpu_custom_call.1} parent=1 // pred_check
      _
    $region23: #{tpu_custom_call.1} parent=1 // pred_check_branch
      %35 = sbr.rel (0) target = $region25
    $region24: #{tpu_custom_call.1} parent=1 // pred_region
      %s37 = ssub.s32 1024, 1024
      %38 = vsyncadd [#allocation5], %s37
      %s39 = sshll.u32 [#allocation4], 4
      %s40 = int_to_ptr.vmem [resolvable:$true] %s39
      %45 = dma.hbm_to_vmem [thread:$0]  %s5, 1024, %s40, [#allocation5], 64, 64, 4
    $region25: #{tpu_custom_call.1} parent=1 // pred_fallthru
      _
    // Predicated region
    $region26: #{tpu_custom_call.1} parent=1 // pred_check
      _
    $region27: #{tpu_custom_call.1} parent=1 // pred_check_branch
      %47 = sbr.rel (0) target = $region29
    $region28: #{tpu_custom_call.1} parent=1 // pred_region
      _
    $region29: #{tpu_custom_call.1} parent=1 // pred_fallthru
      _
    // Predicated region
    $region30: #{tpu_custom_call.1} parent=1 // pred_check
      _
    $region31: #{tpu_custom_call.1} parent=1 // pred_check_branch
      %49 = sbr.rel (0) target = $region33
    $region32: #{tpu_custom_call.1} parent=1 // pred_region
      %50 = dma.done [#allocation3], 1024
    $region33: #{tpu_custom_call.1} parent=1 // pred_fallthru
      _
    // Predicated region
    $region34: #{tpu_custom_call.1} parent=1 // pred_check
      _
    $region35: #{tpu_custom_call.1} parent=1 // pred_check_branch
      %52 = sbr.rel (0) target = $region37
    $region36: #{tpu_custom_call.1} parent=1 // pred_region
      %53 = dma.done [#allocation5], 1024
    $region37: #{tpu_custom_call.1} parent=1 // pred_fallthru
      _
    %v55 = vld [vmem:[%s0] sm:$0xff]
    %v56 = vld [vmem:[%s1] sm:$0xf]
    %v57 = vld [vmem:[%s2] sm:$0x1]
    %v59 = vlaneseq
    %v60 = vshrl.u32 %v59, 7
    %v61 = vsub.s32 0, %v60
    %v62 = vrot.slane %v57, %v61
    %vm64 = vcmask 31744
    %v66 = vsel %vm64, %v55, 0
    %vm68 = vcmask 1043456
    %v70 = vsel %vm68, %v56, 0
    %72 = vmatprep.subr.mxu0 0.0
    %73 = vmatpush1.msra.mxu0 0.0
    %74 = vmatprep.subr.mxu0 0.0
    %75 = vmatpush1.msra.mxu0 0.0
    %76 = vmatprep.subr.mxu0 0.0
    %77 = vmatpush1.msra.mxu0 0.0
    %78 = vmatprep.subr.mxu0 0.0
    %79 = vmatpush1.msra.mxu0 0.0
    %80 = vmatprep.subr.mxu0 0.0
    %81 = vmatpush1.msra.mxu0 0.0
    %82 = vmatprep.subr.mxu0 0.0
    %83 = vmatpush1.msra.mxu0 0.0
    %84 = vmatprep.subr.mxu0 0.0
    %85 = vmatpush1.msra.mxu0 0.0
    %86 = vmatprep.subr.mxu0 0.0
    %87 = vmatpush1.msra.mxu0 0.0
    %88 = vmatprep.subr.mxu0 0.0
    %89 = vmatpush1.msra.mxu0 0.0
    %90 = vmatprep.subr.mxu0 0.0
    %91 = vmatpush1.msra.mxu0 0.0
    %92 = vmatprep.subr.mxu0 0.0
    %93 = vmatpush1.msra.mxu0 0.0
    %94 = vmatprep.subr.mxu0 0.0
    %95 = vmatpush1.msra.mxu0 0.0
    %96 = vmatprep.subr.mxu0 0.0
    %97 = vmatpush1.msra.mxu0 0.0
    %98 = vmatprep.subr.mxu0 0.0
    %99 = vmatpush1.msra.mxu0 0.0
    %100 = vmatprep.subr.mxu0 0.0
    %101 = vmatpush1.msra.mxu0 0.0
    %102 = vmatprep.subr.mxu0 0.0
    %103 = vmatpush1.msra.mxu0 %v70
    %104 = vmatprep.subr.mxu0 0.0
    %105 = vmatpush2.msra.mxu0 0.0
    %106 = vmatprep.subr.mxu0 0.0
    %107 = vmatpush2.msra.mxu0 0.0
    %108 = vmatprep.subr.mxu0 0.0
    %109 = vmatpush2.msra.mxu0 0.0
    %110 = vmatprep.subr.mxu0 0.0
    %111 = vmatpush2.msra.mxu0 0.0
    %112 = vmatprep.subr.mxu0 0.0
    %113 = vmatpush2.msra.mxu0 0.0
    %114 = vmatprep.subr.mxu0 0.0
    %115 = vmatpush2.msra.mxu0 0.0
    %116 = vmatprep.subr.mxu0 0.0
    %117 = vmatpush2.msra.mxu0 0.0
    %118 = vmatprep.subr.mxu0 0.0
    %119 = vmatpush2.msra.mxu0 0.0
    %120 = vmatprep.subr.mxu0 0.0
    %121 = vmatpush2.msra.mxu0 0.0
    %122 = vmatprep.subr.mxu0 0.0
    %123 = vmatpush2.msra.mxu0 0.0
    %124 = vmatprep.subr.mxu0 0.0
    %125 = vmatpush2.msra.mxu0 0.0
    %126 = vmatprep.subr.mxu0 0.0
    %127 = vmatpush2.msra.mxu0 0.0
    %128 = vmatprep.subr.mxu0 0.0
    %129 = vmatpush2.msra.mxu0 0.0
    %130 = vmatprep.subr.mxu0 0.0
    %131 = vmatpush2.msra.mxu0 0.0
    %132 = vmatprep.subr.mxu0 0.0
    %133 = vmatpush2.msra.mxu0 0.0
    %134 = vmatprep.subr.mxu0 0.0
    %135 = vmatpush2.msra.mxu0 0.0
    %136 = vmatprep.mubr.f32.mxu0 0.0
    %137 = vmatmul.mubr.f32.gmra.mxu0 %v66
    %v138 = vpop.f32.mrf.mxu0
    %v139 = vadd.f32 %v62, %v138
    %v140 = vpop.f32.mrf.mxu0
    %141 = vdwg.mxu0
    %v142 = vmax.f32 %v139, 0.0
    %v143 = vpack.c.bf16 %v142, %v142
    %v144 = vld [vmem:[#allocation2] sm:$0xf]
    %v145 = vld [vmem:[#allocation2 + $0x4] sm:$0xf]
    %v146 = vld [vmem:[#allocation2 + $0x8] sm:$0xf]
    %v147 = vld [vmem:[#allocation2 + $0xc] sm:$0xf]
    %v148 = vld [vmem:[#allocation2 + $0x10] sm:$0xf]
    %v149 = vld [vmem:[#allocation2 + $0x14] sm:$0xf]
    %v150 = vld [vmem:[#allocation2 + $0x18] sm:$0xf]
    %v151 = vld [vmem:[#allocation2 + $0x1c] sm:$0xf]
    %v152 = vld [vmem:[#allocation2 + $0x20] sm:$0xf]
    %v153 = vld [vmem:[#allocation2 + $0x24] sm:$0xf]
    %v154 = vld [vmem:[#allocation2 + $0x28] sm:$0xf]
    %v155 = vld [vmem:[#allocation2 + $0x2c] sm:$0xf]
    %v156 = vld [vmem:[#allocation2 + $0x30] sm:$0xf]
    %v157 = vld [vmem:[#allocation2 + $0x34] sm:$0xf]
    %v158 = vld [vmem:[#allocation2 + $0x38] sm:$0xf]
    %v159 = vld [vmem:[#allocation2 + $0x3c] sm:$0xf]
    %v160 = vld [vmem:[%s4] sm:$0x1]
    %v162 = vlaneseq
    %v163 = vshrl.u32 %v162, 7
    %v164 = vsub.s32 0, %v163
    %v165 = vrot.slane %v160, %v164
    %v183 = vunpack.c.l.b16 %v144
    %v184 = vunpack.c.l.b16 %v145
    %v185 = vunpack.c.l.b16 %v146
    %v186 = vunpack.c.l.b16 %v147
    %v187 = vunpack.c.l.b16 %v148
    %v188 = vunpack.c.l.b16 %v149
    %v189 = vunpack.c.l.b16 %v150
    %v190 = vunpack.c.l.b16 %v151
    %v191 = vunpack.c.l.b16 %v152
    %v192 = vunpack.c.l.b16 %v153
    %v193 = vunpack.c.l.b16 %v154
    %v194 = vunpack.c.l.b16 %v155
    %v195 = vunpack.c.l.b16 %v156
    %v196 = vunpack.c.l.b16 %v157
    %v197 = vunpack.c.l.b16 %v158
    %v198 = vunpack.c.l.b16 %v159
    %v199 = vpack.c.b16 %v184, %v183
    %v200 = vpack.c.b16 %v186, %v185
    %v201 = vpack.c.b16 %v188, %v187
    %v202 = vpack.c.b16 %v190, %v189
    %v203 = vpack.c.b16 %v192, %v191
    %v204 = vpack.c.b16 %v194, %v193
    %v205 = vpack.c.b16 %v196, %v195
    %v206 = vpack.c.b16 %v198, %v197
    %215 = vmatprep.subr.bf16.mxu0 0
    %216 = vmatpush1.bf16.msra.mxu0 %v206
    %217 = vmatprep.subr.bf16.mxu0 0
    %218 = vmatpush1.bf16.msra.mxu0 %v205
    %219 = vmatprep.subr.bf16.mxu0 0
    %220 = vmatpush1.bf16.msra.mxu0 %v204
    %221 = vmatprep.subr.bf16.mxu0 0
    %222 = vmatpush1.bf16.msra.mxu0 %v203
    %223 = vmatprep.subr.bf16.mxu0 0
    %224 = vmatpush1.bf16.msra.mxu0 %v202
    %225 = vmatprep.subr.bf16.mxu0 0
    %226 = vmatpush1.bf16.msra.mxu0 %v201
    %227 = vmatprep.subr.bf16.mxu0 0
    %228 = vmatpush1.bf16.msra.mxu0 %v200
    %229 = vmatprep.subr.bf16.mxu0 0
    %230 = vmatpush1.bf16.msra.mxu0 %v199
    %231 = vmatprep.subr.bf16.mxu0 0
    %232 = vmatpush2.bf16.msra.mxu0 0
    %233 = vmatprep.subr.bf16.mxu0 0
    %234 = vmatpush2.bf16.msra.mxu0 0
    %235 = vmatprep.subr.bf16.mxu0 0
    %236 = vmatpush2.bf16.msra.mxu0 0
    %237 = vmatprep.subr.bf16.mxu0 0
    %238 = vmatpush2.bf16.msra.mxu0 0
    %239 = vmatprep.subr.bf16.mxu0 0
    %240 = vmatpush2.bf16.msra.mxu0 0
    %241 = vmatprep.subr.bf16.mxu0 0
    %242 = vmatpush2.bf16.msra.mxu0 0
    %243 = vmatprep.subr.bf16.mxu0 0
    %244 = vmatpush2.bf16.msra.mxu0 0
    %245 = vmatprep.subr.bf16.mxu0 0
    %246 = vmatpush2.bf16.msra.mxu0 0
    %247 = vmatprep.mubr.bf16.mxu0 0
    %248 = vmatmul.mubr.bf16.gmra.mxu0 %v143
    %v249 = vpop.f32.mrf.mxu0
    %v250 = vadd.f32 %v165, %v249
    %v251 = vpop.f32.mrf.mxu0
    %v252 = vpop.f32.mrf.mxu0
    %v253 = vpop.f32.mrf.mxu0
    %254 = vdwg.mxu0
    %v255 = vmax.f32 %v250, 0.0
    %v256 = vpack.c.bf16 %v255, %v255
    %v257 = vld [vmem:[#allocation4] sm:$0xf]
    %v258 = vld [vmem:[#allocation4 + $0x4] sm:$0xf]
    %v259 = vld [vmem:[#allocation4 + $0x8] sm:$0xf]
    %v260 = vld [vmem:[#allocation4 + $0xc] sm:$0xf]
    %v261 = vld [vmem:[#allocation4 + $0x10] sm:$0xf]
    %v262 = vld [vmem:[#allocation4 + $0x14] sm:$0xf]
    %v263 = vld [vmem:[#allocation4 + $0x18] sm:$0xf]
    %v264 = vld [vmem:[#allocation4 + $0x1c] sm:$0xf]
    %v265 = vld [vmem:[#allocation4 + $0x20] sm:$0xf]
    %v266 = vld [vmem:[#allocation4 + $0x24] sm:$0xf]
    %v267 = vld [vmem:[#allocation4 + $0x28] sm:$0xf]
    %v268 = vld [vmem:[#allocation4 + $0x2c] sm:$0xf]
    %v269 = vld [vmem:[#allocation4 + $0x30] sm:$0xf]
    %v270 = vld [vmem:[#allocation4 + $0x34] sm:$0xf]
    %v271 = vld [vmem:[#allocation4 + $0x38] sm:$0xf]
    %v272 = vld [vmem:[#allocation4 + $0x3c] sm:$0xf]
    %v273 = vld [vmem:[%s6] sm:$0x1]
    %v275 = vlaneseq
    %v276 = vshrl.u32 %v275, 7
    %v277 = vsub.s32 0, %v276
    %v278 = vrot.slane %v273, %v277
    %v296 = vunpack.c.l.b16 %v257
    %v297 = vunpack.c.l.b16 %v258
    %v298 = vunpack.c.l.b16 %v259
    %v299 = vunpack.c.l.b16 %v260
    %v300 = vunpack.c.l.b16 %v261
    %v301 = vunpack.c.l.b16 %v262
    %v302 = vunpack.c.l.b16 %v263
    %v303 = vunpack.c.l.b16 %v264
    %v304 = vunpack.c.l.b16 %v265
    %v305 = vunpack.c.l.b16 %v266
    %v306 = vunpack.c.l.b16 %v267
    %v307 = vunpack.c.l.b16 %v268
    %v308 = vunpack.c.l.b16 %v269
    %v309 = vunpack.c.l.b16 %v270
    %v310 = vunpack.c.l.b16 %v271
    %v311 = vunpack.c.l.b16 %v272
    %v312 = vpack.c.b16 %v297, %v296
    %v313 = vpack.c.b16 %v299, %v298
    %v314 = vpack.c.b16 %v301, %v300
    %v315 = vpack.c.b16 %v303, %v302
    %v316 = vpack.c.b16 %v305, %v304
    %v317 = vpack.c.b16 %v307, %v306
    %v318 = vpack.c.b16 %v309, %v308
    %v319 = vpack.c.b16 %v311, %v310
    %328 = vmatprep.subr.bf16.mxu0 0
    %329 = vmatpush1.bf16.msra.mxu0 %v319
    %330 = vmatprep.subr.bf16.mxu0 0
    %331 = vmatpush1.bf16.msra.mxu0 %v318
    %332 = vmatprep.subr.bf16.mxu0 0
    %333 = vmatpush1.bf16.msra.mxu0 %v317
    %334 = vmatprep.subr.bf16.mxu0 0
    %335 = vmatpush1.bf16.msra.mxu0 %v316
    %336 = vmatprep.subr.bf16.mxu0 0
    %337 = vmatpush1.bf16.msra.mxu0 %v315
    %338 = vmatprep.subr.bf16.mxu0 0
    %339 = vmatpush1.bf16.msra.mxu0 %v314
    %340 = vmatprep.subr.bf16.mxu0 0
    %341 = vmatpush1.bf16.msra.mxu0 %v313
    %342 = vmatprep.subr.bf16.mxu0 0
    %343 = vmatpush1.bf16.msra.mxu0 %v312
    %344 = vmatprep.subr.bf16.mxu0 0
    %345 = vmatpush2.bf16.msra.mxu0 0
    %346 = vmatprep.subr.bf16.mxu0 0
    %347 = vmatpush2.bf16.msra.mxu0 0
    %348 = vmatprep.subr.bf16.mxu0 0
    %349 = vmatpush2.bf16.msra.mxu0 0
    %350 = vmatprep.subr.bf16.mxu0 0
    %351 = vmatpush2.bf16.msra.mxu0 0
    %352 = vmatprep.subr.bf16.mxu0 0
    %353 = vmatpush2.bf16.msra.mxu0 0
    %354 = vmatprep.subr.bf16.mxu0 0
    %355 = vmatpush2.bf16.msra.mxu0 0
    %356 = vmatprep.subr.bf16.mxu0 0
    %357 = vmatpush2.bf16.msra.mxu0 0
    %358 = vmatprep.subr.bf16.mxu0 0
    %359 = vmatpush2.bf16.msra.mxu0 0
    %360 = vmatprep.mubr.bf16.mxu0 0
    %361 = vmatmul.mubr.bf16.gmra.mxu0 %v256
    %v362 = vpop.f32.mrf.mxu0
    %v363 = vadd.f32 %v278, %v362
    %v364 = vpop.f32.mrf.mxu0
    %v365 = vpop.f32.mrf.mxu0
    %v366 = vpop.f32.mrf.mxu0
    %367 = vdwg.mxu0
    %vm368 = vcmask 15360
    %369 = vst.msk [vmem:[%s7] sm:$0xff] %vm368, %v363
    // Predicated region
    $region38: #{tpu_custom_call.1} parent=1 // pred_check
      _
    $region39: #{tpu_custom_call.1} parent=1 // pred_check_branch
      %371 = sbr.rel (0) target = $region41
    $region40: #{tpu_custom_call.1} parent=1 // pred_region
      _
    $region41: #{tpu_custom_call.1} parent=1 // pred_fallthru
      _
    // Predicated region
    $region42: #{tpu_custom_call.1} parent=1 // pred_check
      _
    $region43: #{tpu_custom_call.1} parent=1 // pred_check_branch
      %373 = sbr.rel (0) target = $region45
    $region44: #{tpu_custom_call.1} parent=1 // pred_region
      _
    $region45: #{tpu_custom_call.1} parent=1 // pred_fallthru
      _
    %374 = vsyncpa [#allocation3], 1
    %375 = vsyncpa [#allocation5], 1

</llo_original>
